<compile_context>
chip_gen: v6e
topology: v6e:2x2x1
jax: 0.10.0
libtpu: 0.0.40
codegen_flags: <defaults>
</compile_context>

<pallas_src>
import math
import jax
import jax.numpy as jnp
from jax.experimental import pallas as pl
from jax.experimental.pallas import tpu as pltpu


def _round_up(x: int, m: int) -> int:
    return (x + m - 1) // m * m


def _pick_tile(extent: int, cap: int, granule: int) -> int:
    """Largest multiple of `granule` that divides `extent` and is <= cap.

    `extent` must already be a multiple of `granule`, so the loop always
    terminates with a valid divisor (worst case `granule` itself).
    """
    if extent <= cap:
        return extent
    t = (cap // granule) * granule
    while extent % t:
        t -= granule
    return t


def _gcn_linear_fused_kernel(x_ref, w_ref, b_ref, o_ref):
    """Single-K-block path (weight resident in VMEM): out = x @ w + b.

    x_ref: (tm, tk)  activation tile (compute dtype)
    w_ref: (tk, tn)  pre-transposed weight tile (compute dtype)
    b_ref: (1, tn)   bias tile (f32)
    o_ref: (tm, tn)  output tile
    """
    acc = jnp.dot(x_ref[...], w_ref[...], preferred_element_type=jnp.float32)
    o_ref[...] = (acc + b_ref[...].astype(jnp.float32)).astype(o_ref.dtype)


def _gcn_linear_acc_kernel(x_ref, w_ref, b_ref, o_ref, acc_ref):
    """General path: K-reduction over grid axis 2 with an f32 VMEM accumulator.

    Bias is folded into the accumulator init at k == 0 (no epilogue add).
    """
    k = pl.program_id(2)

    @pl.when(k == 0)
    def _():
        acc_ref[...] = jnp.broadcast_to(
            b_ref[...].astype(jnp.float32), acc_ref.shape)

    acc_ref[...] += jnp.dot(x_ref[...], w_ref[...],
                            preferred_element_type=jnp.float32)

    @pl.when(k == pl.num_programs(2) - 1)
    def _():
        o_ref[...] = acc_ref[...].astype(o_ref.dtype)


def gcn_layer_forward(x, weight, bias, *, compute_dtype=jnp.bfloat16):
    """out = x @ weight.T + bias  (torch.nn.Linear forward).

    x: (N, in_dim); weight: (out_dim, in_dim); bias: (out_dim,).
    compute_dtype: dtype fed to the MXU (default bfloat16; accumulation is
      always f32 and the output keeps x.dtype). Pass None for exact
      input-dtype compute.
    """
    n, in_dim = x.shape
    out_dim = weight.shape[0]
    out_dtype = x.dtype

    cdt = jnp.dtype(compute_dtype) if compute_dtype is not None else jnp.dtype(x.dtype)
    itemsize = cdt.itemsize
    use_bf16_packing = itemsize < 4

    # --- Padded extents: only to the hardware granules, not to tile size. ---
    m_granule = 16 if use_bf16_packing else 8   # sublane packing for <32-bit
    m_pad = _round_up(n, m_granule)
    k_pad = _round_up(in_dim, 128)
    n_pad = _round_up(out_dim, 128)

    # --- Tile selection: divisors of the padded extents, VMEM-safe caps. ---
    tm = _pick_tile(m_pad, 512, m_granule)
    tn = _pick_tile(n_pad, 512, 128)
    tk = _pick_tile(k_pad, 1024 if use_bf16_packing else 512, 128)

    # Megacore: make sure there are >=2 parallel (M, N) tiles when possible so
    # both v7x TensorCores get work (costs at most `m_granule` extra pad rows).
    if (m_pad // tm) * (n_pad // tn) == 1 and m_pad > m_granule:
        m_pad = _round_up(m_pad, 2 * m_granule)
        tm = m_pad // 2

    grid_m, grid_n, grid_k = m_pad // tm, n_pad // tn, k_pad // tk

    # --- Operand prep (pad only when needed; weight transposed once). ---
    pad_m, pad_k, pad_n = m_pad - n, k_pad - in_dim, n_pad - out_dim

    x_p = x if (pad_m == 0 and pad_k == 0) else jnp.pad(x, ((0, pad_m), (0, pad_k)))
    w_t = weight.T                                        # (in_dim, out_dim), one-time
    w_p = w_t if (pad_k == 0 and pad_n == 0) else jnp.pad(w_t, ((0, pad_k), (0, pad_n)))
    b_p = (bias if pad_n == 0 else jnp.pad(bias, (0, pad_n))).astype(jnp.float32)
    b_p = b_p.reshape(1, n_pad)

    if x_p.dtype != cdt:
        x_p = x_p.astype(cdt)
    if w_p.dtype != cdt:
        w_p = w_p.astype(cdt)

    # --- Cost estimate reflecting the tiled schedule's real HBM traffic. ---
    cost = pl.CostEstimate(
        flops=2 * m_pad * n_pad * k_pad,
        transcendentals=0,
        bytes_accessed=(grid_n * m_pad * k_pad * itemsize      # x, once per N tile
                        + grid_m * k_pad * n_pad * itemsize    # w, once per M tile
                        + grid_m * n_pad * 4                   # bias
                        + m_pad * n_pad * jnp.dtype(out_dtype).itemsize),
    )

    if grid_k == 1:
        # Weight/bias block index is constant across the grid -> fetched once,
        # resident in VMEM; only x tiles stream. No accumulator needed.
        kernel = _gcn_linear_fused_kernel
        grid = (grid_m, grid_n)
        in_specs = [
            pl.BlockSpec((tm, tk), lambda i, j: (i, 0)),   # x
            pl.BlockSpec((tk, tn), lambda i, j: (0, j)),   # weight (in, out)
            pl.BlockSpec((1, tn), lambda i, j: (0, j)),    # bias
        ]
        out_specs = pl.BlockSpec((tm, tn), lambda i, j: (i, j))
        scratch_shapes = []
        dim_sem = ("parallel", "parallel")
    else:
        kernel = _gcn_linear_acc_kernel
        grid = (grid_m, grid_n, grid_k)
        in_specs = [
            pl.BlockSpec((tm, tk), lambda i, j, k: (i, k)),   # x
            pl.BlockSpec((tk, tn), lambda i, j, k: (k, j)),   # weight (in, out)
            pl.BlockSpec((1, tn), lambda i, j, k: (0, j)),    # bias
        ]
        out_specs = pl.BlockSpec((tm, tn), lambda i, j, k: (i, j))
        scratch_shapes = [pltpu.VMEM((tm, tn), jnp.float32)]
        dim_sem = ("parallel", "parallel", "arbitrary")

    out = pl.pallas_call(
        kernel,
        out_shape=jax.ShapeDtypeStruct((m_pad, n_pad), out_dtype),
        grid_spec=pltpu.PrefetchScalarGridSpec(
            num_scalar_prefetch=0,
            grid=grid,
            in_specs=in_specs,
            out_specs=out_specs,
            scratch_shapes=scratch_shapes,
        ),
        compiler_params=pltpu.CompilerParams(dimension_semantics=dim_sem),
        cost_estimate=cost,
    )(x_p, w_p, b_p)

    if pad_m or pad_n:
        out = out[:n, :out_dim]
    return out


def init_gcn_params(key, in_dim, out_dim):
    """Deterministic init mimicking torch.nn.Linear default (kaiming-uniform-ish)."""
    k_w, k_b = jax.random.split(key)
    bound = 1.0 / math.sqrt(in_dim)
    weight = jax.random.uniform(k_w, (out_dim, in_dim), jnp.float32, -bound, bound)
    bias = jax.random.uniform(k_b, (out_dim,), jnp.float32, -bound, bound)
    return weight, bias


if __name__ == "__main__":
    key = jax.random.PRNGKey(0)
    k_x1, k_p1, k_x2, k_p2 = jax.random.split(key, 4)

    # --- Small case matching the module's toy usage (8 nodes, 32 -> 32),
    #     exact f32 compute path. ---
    n1, in1, out1 = 8, 32, 32
    x1 = jax.random.normal(k_x1, (n1, in1), jnp.float32)
    w1, b1 = init_gcn_params(k_p1, in1, out1)
    y1 = jax.block_until_ready(gcn_layer_forward(x1, w1, b1, compute_dtype=None))
    ref1 = x1 @ w1.T + b1
    assert y1.shape == (n1, out1)
    assert jnp.allclose(y1, ref1, atol=1e-5, rtol=1e-5)

    # --- Larger, non-tile-aligned case: default bf16 compute / f32 accumulate,
    #     resident-weight fused path, M split in two for v7x megacore. ---
    n2, in2, out2 = 272, 1024, 384
    x2 = jax.random.normal(k_x2, (n2, in2), jnp.float32)
    w2, b2 = init_gcn_params(k_p2, in2, out2)
    y2 = jax.block_until_ready(gcn_layer_forward(x2, w2, b2))  # bf16 default
    ref2 = x2 @ w2.T + b2
    assert y2.shape == (n2, out2)
    assert jnp.allclose(y2, ref2, atol=5e-2, rtol=5e-2)

    # --- Same case in f32 compute: exercises the multi-K-block accumulator
    #     kernel (tk = 512 < k_pad = 1024). ---
    y3 = jax.block_until_ready(gcn_layer_forward(x2, w2, b2, compute_dtype=None))
    assert y3.shape == (n2, out2)
    assert jnp.allclose(y3, ref2, atol=1e-2, rtol=1e-2)

    print("KERNEL_OK")
</pallas_src>

<mosaic_0001>
module attributes {stable_mosaic.version = 11 : i64} {
  func.func @_gcn_linear_fused_kernel(%arg0: i32, %arg1: i32, %arg2: memref<8x128xf32, #tpu.memory_space<vmem>>, %arg3: memref<128x128xf32, #tpu.memory_space<vmem>>, %arg4: memref<1x128xf32, #tpu.memory_space<vmem>>, %arg5: memref<8x128xf32, #tpu.memory_space<vmem>>) attributes {dimension_semantics = [#tpu.dimension_semantics<parallel>, #tpu.dimension_semantics<parallel>], iteration_bounds = array<i64: 1, 1>, scalar_prefetch = 0 : i64, scratch_operands = 0 : i64, tpu.core_type = #tpu.core_type<tc>, window_params = [{transform_indices = @transform_0, window_bounds = array<i64: 8, 128>}, {transform_indices = @transform_1, window_bounds = array<i64: 128, 128>}, {transform_indices = @transform_2, window_bounds = array<i64: 1, 128>}, {transform_indices = @transform_3, window_bounds = array<i64: 8, 128>}]} {
    %c0 = arith.constant 0 : index
    %c0_0 = arith.constant 0 : index
    %0 = vector.load %arg2[%c0, %c0_0] : memref<8x128xf32, #tpu.memory_space<vmem>>, vector<8x128xf32>
    %c0_1 = arith.constant 0 : index
    %c0_2 = arith.constant 0 : index
    %1 = vector.load %arg3[%c0_1, %c0_2] : memref<128x128xf32, #tpu.memory_space<vmem>>, vector<128x128xf32>
    %cst = arith.constant dense<0.000000e+00> : vector<8x128xf32>
    %2 = tpu.matmul %0, %1, %cst {dimension_numbers = #tpu.dot_dimension_numbers<[1], [0], [0], [1], [0, 0, 1, 1], [], []>} : vector<8x128xf32>, vector<128x128xf32>, vector<8x128xf32> -> vector<8x128xf32>
    %c0_3 = arith.constant 0 : index
    %c0_4 = arith.constant 0 : index
    %3 = vector.load %arg4[%c0_3, %c0_4] : memref<1x128xf32, #tpu.memory_space<vmem>>, vector<1x128xf32>
    %4 = vector.broadcast %3 : vector<1x128xf32> to vector<8x128xf32>
    %5 = arith.addf %2, %4 : vector<8x128xf32>
    %c0_5 = arith.constant 0 : index
    %c0_6 = arith.constant 0 : index
    %6 = vector.load %arg5[%c0_5, %c0_6] : memref<8x128xf32, #tpu.memory_space<vmem>>, vector<8x128xf32>
    tpu.vector_store %arg5[%c0_5, %c0_6], %5 {strides = array<i32>} : memref<8x128xf32, #tpu.memory_space<vmem>>, vector<8x128xf32>,
    return
  }
  func.func @transform_0(%arg0: i32, %arg1: i32) -> (i32, i32) {
    %c0_i32 = arith.constant 0 : i32
    %c0_i32_0 = arith.constant 0 : i32
    return %arg0, %c0_i32 : i32, i32
  }
  func.func @transform_1(%arg0: i32, %arg1: i32) -> (i32, i32) {
    %c0_i32 = arith.constant 0 : i32
    %c0_i32_0 = arith.constant 0 : i32
    return %c0_i32, %arg1 : i32, i32
  }
  func.func @transform_2(%arg0: i32, %arg1: i32) -> (i32, i32) {
    %c0_i32 = arith.constant 0 : i32
    %c0_i32_0 = arith.constant 0 : i32
    return %c0_i32, %arg1 : i32, i32
  }
  func.func @transform_3(%arg0: i32, %arg1: i32) -> (i32, i32) {
    %c0_i32 = arith.constant 0 : i32
    return %arg0, %arg1 : i32, i32
  }
}

</mosaic_0001>

<llo_original>
// kernel: tpu_custom_call.1
$region0: #{tpu_custom_call.1}
  #allocation0 [shape = 'u32[]', space=smem, size = 0x4, offset = 0x4, fixed_abs, tag = 'smem constant byte address 0x4 - core index']
  #allocation1 [shape = 'u32[144,128]{1,0:T(1,128)}', space=vmem, size = 0x12000, scoped, tag = 'internal scratch']
  %s0 = inlined_call_operand.hbm [shape: f32[8,128], index: 0, kind: input, shape index: {}]
  %s1 = inlined_call_operand.hbm [shape: f32[128,128], index: 1, kind: input, shape index: {}]
  %s2 = inlined_call_operand.vmem [shape: f32[1,128], index: 2, kind: input, shape index: {}]
  %s3 = inlined_call_operand.hbm [shape: f32[8,128], index: 3, kind: output, shape index: {}]
  %s4 = sld [smem:[#allocation0]]
  $region30: #{tpu_custom_call.1} parent=0
    _
  %s6 = ssub.s32 1, %s4
  %s7 = scalar_select 0, %s6, %s4
  $region1: #{tpu_custom_call.1} parent=0
    #allocation2 [shape = 'u8[4096]{0}', space=vmem, size = 0x1000, scoped, tag = 'input window, operand 0, single buffered']
    #allocation3 [shape = 's32[1]{0}', space=sflag, size = 0x4, scoped, tag = 'scoped memory for tpu_custom_call.1']
    #allocation4 [shape = 's32[1]{0}', space=sflag, size = 0x4, scoped, tag = 'scoped memory for tpu_custom_call.1']
    #allocation5 [shape = 'u8[65536]{0}', space=vmem, size = 0x10000, scoped, tag = 'input window, operand 1, single buffered']
    #allocation6 [shape = 's32[1]{0}', space=sflag, size = 0x4, scoped, tag = 'scoped memory for tpu_custom_call.1']
    #allocation7 [shape = 'u8[4096]{0}', space=vmem, size = 0x1000, scoped, tag = 'output window, operand 0, single buffered']
    %8 = vsyncpa [#allocation3], 0
    %9 = vsyncpa [#allocation6], 0
    %10 = vsyncpa [#allocation4], 0
    // Predicated region
    $region2: #{tpu_custom_call.1} parent=1 // pred_check
      _
    $region3: #{tpu_custom_call.1} parent=1 // pred_check_branch
      %12 = sbr.rel (0) target = $region5
    $region4: #{tpu_custom_call.1} parent=1 // pred_region
      %s14 = ssub.s32 128, 128
      %15 = vsyncadd [#allocation3], %s14
      %s17 = sshll.u32 [#allocation2], 4
      %s18 = int_to_ptr.vmem [resolvable:$true] %s17
      %20 = dma.hbm_to_vmem [thread:$0]  %s0, 128, %s18, [#allocation3]
    $region5: #{tpu_custom_call.1} parent=1 // pred_fallthru
      _
    // Predicated region
    $region6: #{tpu_custom_call.1} parent=1 // pred_check
      _
    $region7: #{tpu_custom_call.1} parent=1 // pred_check_branch
      %22 = sbr.rel (0) target = $region9
    $region8: #{tpu_custom_call.1} parent=1 // pred_region
      %s24 = ssub.s32 2048, 2048
      %25 = vsyncadd [#allocation6], %s24
      %s26 = sshll.u32 [#allocation5], 4
      %s27 = int_to_ptr.vmem [resolvable:$true] %s26
      %32 = dma.hbm_to_vmem [thread:$0]  %s1, 2048, %s27, [#allocation6], 128, 128, 8
    $region9: #{tpu_custom_call.1} parent=1 // pred_fallthru
      _
    // Predicated region
    $region10: #{tpu_custom_call.1} parent=1 // pred_check
      _
    $region11: #{tpu_custom_call.1} parent=1 // pred_check_branch
      %34 = sbr.rel (0) target = $region13
    $region12: #{tpu_custom_call.1} parent=1 // pred_region
      _
    $region13: #{tpu_custom_call.1} parent=1 // pred_fallthru
      _
    // Predicated region
    $region14: #{tpu_custom_call.1} parent=1 // pred_check
      _
    $region15: #{tpu_custom_call.1} parent=1 // pred_check_branch
      %36 = sbr.rel (0) target = $region17
    $region16: #{tpu_custom_call.1} parent=1 // pred_region
      %37 = dma.done [#allocation3], 128
    $region17: #{tpu_custom_call.1} parent=1 // pred_fallthru
      _
    // Predicated region
    $region18: #{tpu_custom_call.1} parent=1 // pred_check
      _
    $region19: #{tpu_custom_call.1} parent=1 // pred_check_branch
      %39 = sbr.rel (0) target = $region21
    $region20: #{tpu_custom_call.1} parent=1 // pred_region
      %40 = dma.done [#allocation6], 2048
    $region21: #{tpu_custom_call.1} parent=1 // pred_fallthru
      _
    %v41 = vld [vmem:[#allocation2] sm:$0xff]
    %v42 = vld [vmem:[#allocation5] sm:$0xff]
    %v43 = vld [vmem:[#allocation5 + $0x8] sm:$0xff]
    %v44 = vld [vmem:[#allocation5 + $0x10] sm:$0xff]
    %v45 = vld [vmem:[#allocation5 + $0x18] sm:$0xff]
    %v46 = vld [vmem:[#allocation5 + $0x20] sm:$0xff]
    %v47 = vld [vmem:[#allocation5 + $0x28] sm:$0xff]
    %v48 = vld [vmem:[#allocation5 + $0x30] sm:$0xff]
    %v49 = vld [vmem:[#allocation5 + $0x38] sm:$0xff]
    %v50 = vld [vmem:[#allocation5 + $0x40] sm:$0xff]
    %v51 = vld [vmem:[#allocation5 + $0x48] sm:$0xff]
    %v52 = vld [vmem:[#allocation5 + $0x50] sm:$0xff]
    %v53 = vld [vmem:[#allocation5 + $0x58] sm:$0xff]
    %v54 = vld [vmem:[#allocation5 + $0x60] sm:$0xff]
    %v55 = vld [vmem:[#allocation5 + $0x68] sm:$0xff]
    %v56 = vld [vmem:[#allocation5 + $0x70] sm:$0xff]
    %v57 = vld [vmem:[#allocation5 + $0x78] sm:$0xff]
    %v58 = vld [vmem:[%s2] sm:$0x1]
    %v60 = vlaneseq
    %v61 = vshrl.u32 %v60, 7
    %v62 = vsub.s32 0, %v61
    %v63 = vrot.slane %v58, %v62
    %65 = vmatprep.subr.mxu0 0.0
    %66 = vmatpush1.msra.mxu0 %v57
    %67 = vmatprep.subr.mxu0 0.0
    %68 = vmatpush1.msra.mxu0 %v56
    %69 = vmatprep.subr.mxu0 0.0
    %70 = vmatpush1.msra.mxu0 %v55
    %71 = vmatprep.subr.mxu0 0.0
    %72 = vmatpush1.msra.mxu0 %v54
    %73 = vmatprep.subr.mxu0 0.0
    %74 = vmatpush1.msra.mxu0 %v53
    %75 = vmatprep.subr.mxu0 0.0
    %76 = vmatpush1.msra.mxu0 %v52
    %77 = vmatprep.subr.mxu0 0.0
    %78 = vmatpush1.msra.mxu0 %v51
    %79 = vmatprep.subr.mxu0 0.0
    %80 = vmatpush1.msra.mxu0 %v50
    %81 = vmatprep.subr.mxu0 0.0
    %82 = vmatpush1.msra.mxu0 %v49
    %83 = vmatprep.subr.mxu0 0.0
    %84 = vmatpush1.msra.mxu0 %v48
    %85 = vmatprep.subr.mxu0 0.0
    %86 = vmatpush1.msra.mxu0 %v47
    %87 = vmatprep.subr.mxu0 0.0
    %88 = vmatpush1.msra.mxu0 %v46
    %89 = vmatprep.subr.mxu0 0.0
    %90 = vmatpush1.msra.mxu0 %v45
    %91 = vmatprep.subr.mxu0 0.0
    %92 = vmatpush1.msra.mxu0 %v44
    %93 = vmatprep.subr.mxu0 0.0
    %94 = vmatpush1.msra.mxu0 %v43
    %95 = vmatprep.subr.mxu0 0.0
    %96 = vmatpush1.msra.mxu0 %v42
    %97 = vmatprep.subr.mxu0 0.0
    %98 = vmatpush2.msra.mxu0 0.0
    %99 = vmatprep.subr.mxu0 0.0
    %100 = vmatpush2.msra.mxu0 0.0
    %101 = vmatprep.subr.mxu0 0.0
    %102 = vmatpush2.msra.mxu0 0.0
    %103 = vmatprep.subr.mxu0 0.0
    %104 = vmatpush2.msra.mxu0 0.0
    %105 = vmatprep.subr.mxu0 0.0
    %106 = vmatpush2.msra.mxu0 0.0
    %107 = vmatprep.subr.mxu0 0.0
    %108 = vmatpush2.msra.mxu0 0.0
    %109 = vmatprep.subr.mxu0 0.0
    %110 = vmatpush2.msra.mxu0 0.0
    %111 = vmatprep.subr.mxu0 0.0
    %112 = vmatpush2.msra.mxu0 0.0
    %113 = vmatprep.subr.mxu0 0.0
    %114 = vmatpush2.msra.mxu0 0.0
    %115 = vmatprep.subr.mxu0 0.0
    %116 = vmatpush2.msra.mxu0 0.0
    %117 = vmatprep.subr.mxu0 0.0
    %118 = vmatpush2.msra.mxu0 0.0
    %119 = vmatprep.subr.mxu0 0.0
    %120 = vmatpush2.msra.mxu0 0.0
    %121 = vmatprep.subr.mxu0 0.0
    %122 = vmatpush2.msra.mxu0 0.0
    %123 = vmatprep.subr.mxu0 0.0
    %124 = vmatpush2.msra.mxu0 0.0
    %125 = vmatprep.subr.mxu0 0.0
    %126 = vmatpush2.msra.mxu0 0.0
    %127 = vmatprep.subr.mxu0 0.0
    %128 = vmatpush2.msra.mxu0 0.0
    %129 = vmatprep.mubr.f32.mxu0 0.0
    %130 = vmatmul.mubr.f32.gmra.mxu0 %v41
    %v131 = vpop.f32.mrf.mxu0
    %v132 = vadd.f32 %v63, %v131
    %v133 = vpop.f32.mrf.mxu0
    %134 = vdwg.mxu0
    %135 = vst [vmem:[#allocation7] sm:$0xff] %v132
    // Predicated region
    $region22: #{tpu_custom_call.1} parent=1 // pred_check
      _
    $region23: #{tpu_custom_call.1} parent=1 // pred_check_branch
      %137 = sbr.rel (0) target = $region25
    $region24: #{tpu_custom_call.1} parent=1 // pred_region
      %s139 = ssub.s32 128, 128
      %140 = vsyncadd [#allocation4], %s139
      %s142 = sshll.u32 [#allocation7], 4
      %s143 = int_to_ptr.vmem [resolvable:$true] %s142
      %145 = dma.vmem_to_hbm [thread:$0]  %s143, 128, %s3, [#allocation4]
    $region25: #{tpu_custom_call.1} parent=1 // pred_fallthru
      _
    // Predicated region
    $region26: #{tpu_custom_call.1} parent=1 // pred_check
      _
    $region27: #{tpu_custom_call.1} parent=1 // pred_check_branch
      %147 = sbr.rel (0) target = $region29
    $region28: #{tpu_custom_call.1} parent=1 // pred_region
      %148 = dma.done [#allocation4], 128
    $region29: #{tpu_custom_call.1} parent=1 // pred_fallthru
      _
    %149 = vsyncpa [#allocation3], 1
    %150 = vsyncpa [#allocation6], 1
    %151 = vsyncpa [#allocation4], 1

</llo_original>
